<compile_context>
chip_gen: v7x
topology: tpu7x:2x2x1
jax: 0.10.0
libtpu: 0.0.40
codegen_flags: <defaults>
</compile_context>

<pallas_src>
import functools

import jax
import jax.numpy as jnp
from jax.experimental import pallas as pl
from jax.experimental.pallas import tpu as pltpu

_LANE = 128


# ---------------------------------------------------------------------------
# Kernel: one (Bn, C, TS) tile.  Reduce x^2 over the channel (sublane) axis,
# rsqrt, apply pre-scaled gamma.  Single pass over the tile, f32 accumulation.
# ---------------------------------------------------------------------------
def _rmsnorm_kernel(x_ref, g_ref, o_ref, *, eps):
    x = x_ref[...].astype(jnp.float32)                    # (Bn, C, TS)
    g = g_ref[...]                                        # (1, C, 1) f32, sqrt(C) folded in
    ssq = jnp.sum(x * x, axis=1, keepdims=True)           # (Bn, 1, TS)
    # 1/max(||x||, eps) == rsqrt(max(sum(x^2), eps^2))  (keep ssq in f32: eps^2=1e-24)
    inv = jax.lax.rsqrt(jnp.maximum(ssq, jnp.float32(eps * eps)))
    o_ref[...] = (x * (inv * g)).astype(o_ref.dtype)


def _vmem_capacity_bytes():
    try:
        info = pltpu.get_tpu_info()
        cap = getattr(info, "vmem_capacity_bytes", None)
        if cap:
            return int(cap)
    except Exception:
        pass
    return 64 << 20  # conservative fallback (v7x per-TC); v5e/v6e have 128 MiB


# ---------------------------------------------------------------------------
# Wrapper
# ---------------------------------------------------------------------------
def rms_norm(x, gamma, eps=1e-12, block_spatial=None, block_batch=None):
    """RMSNorm over the channel dim. x: (N, C, D, H, W), gamma: (C, 1, 1, 1)."""
    assert x.ndim == 5, "RMSNorm expects NCDHW input (gamma is (dim,1,1,1))"
    N, C, D, H, W = x.shape
    S = D * H * W
    scale = float(C) ** 0.5
    itemsize = jnp.dtype(x.dtype).itemsize

    x3 = x.reshape(N, C, S)
    # Fold sqrt(C) into gamma, kept in f32 regardless of x dtype.
    g3 = gamma.reshape(1, C, 1).astype(jnp.float32) * scale

    # --- per-generation pipeline budget (in+out double buffers + f32 temps) ---
    vmem_cap = _vmem_capacity_bytes()
    budget = min(vmem_cap // 4, 24 << 20)           # ~16 MiB on v7x, 24 MiB on v5e/v6e
    # per-element footprint: 2x in + 2x out in the native HBM dtype, ~2 f32 temps
    bytes_per_elem = 4 * itemsize + 8
    elems_budget = max(C * _LANE, budget // bytes_per_elem)

    # --- spatial tile: lane-dense (multiple of 128) or the full extent S -----
    if block_spatial is not None:
        assert block_spatial == S or block_spatial % _LANE == 0, \
            "block_spatial must be S or a multiple of 128"
        ts = block_spatial
    else:
        lanes_budget = max(_LANE, elems_budget // C)
        if lanes_budget >= S or S <= _LANE:
            ts = S                                   # whole spatial extent per block
        else:
            ts = max(_LANE, min((lanes_budget // _LANE) * _LANE,
                                (S // _LANE) * _LANE))

    # --- batch blocking when the whole spatial extent fits in one tile -------
    if block_batch is not None:
        bn = int(block_batch)
    else:
        bn = 1
        if ts == S:
            bn = int(max(1, min(N, elems_budget // max(1, C * S))))
    grid_n = pl.cdiv(N, bn)
    grid_s = pl.cdiv(S, ts)

    # Keep >= 2 grid steps on a parallel axis so both v7x TensorCores work.
    if grid_n * grid_s < 2:
        if N > 1:
            bn = (N + 1) // 2
        elif block_spatial is None and ts == S and S >= 2 * _LANE:
            ts = max(_LANE, ((S // 2 + _LANE - 1) // _LANE) * _LANE)
        grid_n = pl.cdiv(N, bn)
        grid_s = pl.cdiv(S, ts)

    # --- explicit scoped-VMEM limit for the chosen block size ----------------
    block_elems = bn * C * ts
    vmem_limit = int(block_elems * bytes_per_elem * 1.25) + (2 << 20)
    vmem_limit = max(vmem_limit, 32 << 20)
    vmem_limit = min(vmem_limit, int(vmem_cap * 0.9))

    cost = pl.CostEstimate(
        flops=3 * N * C * S,
        transcendentals=N * S,
        bytes_accessed=2 * N * C * S * itemsize,
    )

    out = pl.pallas_call(
        functools.partial(_rmsnorm_kernel, eps=eps),
        out_shape=jax.ShapeDtypeStruct((N, C, S), x.dtype),
        grid=(grid_n, grid_s),
        in_specs=[
            pl.BlockSpec((bn, C, ts), lambda n, s: (n, 0, s)),
            pl.BlockSpec((1, C, 1), lambda n, s: (0, 0, 0)),   # gamma resident
        ],
        out_specs=pl.BlockSpec((bn, C, ts), lambda n, s: (n, 0, s)),
        compiler_params=pltpu.CompilerParams(
            dimension_semantics=("parallel", "parallel"),
            vmem_limit_bytes=vmem_limit,
        ),
        cost_estimate=cost,
    )(x3, g3)

    # NOTE: any ragged final spatial/batch block reads garbage OOB lanes, which
    # is safe because the reduction is over channels only and OOB stores are
    # masked.  Do not move the reduction axis without revisiting this.
    return out.reshape(N, C, D, H, W)


# ---------------------------------------------------------------------------
# Module-equivalent wrapper
# ---------------------------------------------------------------------------
class RMSNorm:
    def __init__(self, dim):
        self.dim = dim
        self.scale = dim ** 0.5
        self.gamma = jnp.ones((dim, 1, 1, 1), dtype=jnp.float32)

    def __call__(self, x):
        return rms_norm(x, self.gamma)


# ---------------------------------------------------------------------------
# Reference implementation (plain JAX) for verification
# ---------------------------------------------------------------------------
def _ref_rms_norm(x, gamma, eps=1e-12):
    C = x.shape[1]
    xf = x.astype(jnp.float32)
    norm = jnp.sqrt(jnp.sum(xf * xf, axis=1, keepdims=True))
    y = xf / jnp.maximum(norm, eps) * (float(C) ** 0.5) \
        * gamma.reshape(1, C, 1, 1, 1).astype(jnp.float32)
    return y.astype(x.dtype)


if __name__ == "__main__":
    key = jax.random.PRNGKey(0)
    k1, k2, k3 = jax.random.split(key, 3)

    # ---- test 1: default module (gamma = ones), S multiple of 128 ----------
    N, C, D, H, W = 2, 4, 4, 8, 8                      # S = 256
    x1 = jax.random.normal(k1, (N, C, D, H, W), dtype=jnp.float32)
    norm = RMSNorm(dim=C)
    y1 = norm(x1)
    jax.block_until_ready(y1)
    assert jnp.allclose(y1, _ref_rms_norm(x1, norm.gamma), atol=1e-4, rtol=1e-4), \
        "rmsnorm mismatch (default)"

    # ---- test 2: random gamma + S not a multiple of 128 (ragged tile path) --
    x2 = jax.random.normal(k2, (2, 4, 3, 10, 10), dtype=jnp.float32)   # S = 300
    gamma2 = jax.random.normal(k3, (4, 1, 1, 1), dtype=jnp.float32)
    y2 = rms_norm(x2, gamma2)
    jax.block_until_ready(y2)
    assert jnp.allclose(y2, _ref_rms_norm(x2, gamma2), atol=1e-4, rtol=1e-4), \
        "rmsnorm mismatch (ragged S, random gamma)"

    print("KERNEL_OK")
</pallas_src>

<mosaic_0001>
module attributes {stable_mosaic.version = 11 : i64} {
  func.func @_rmsnorm_kernel(%arg0: i32, %arg1: i32, %arg2: memref<1x4x256xf32, #tpu.memory_space<vmem>>, %arg3: memref<1x4x1xf32, #tpu.memory_space<vmem>>, %arg4: memref<1x4x256xf32, #tpu.memory_space<vmem>>) attributes {dimension_semantics = [#tpu.dimension_semantics<parallel>, #tpu.dimension_semantics<parallel>], iteration_bounds = array<i64: 2, 1>, scalar_prefetch = 0 : i64, scratch_operands = 0 : i64, tpu.core_type = #tpu.core_type<tc>, window_params = [{transform_indices = @transform_0, window_bounds = array<i64: 1, 4, 256>}, {pipeline_mode = #tpu.pipeline_mode<synchronous>, transform_indices = @transform_1, window_bounds = array<i64: 1, 4, 1>}, {transform_indices = @transform_2, window_bounds = array<i64: 1, 4, 256>}]} {
    %c0 = arith.constant 0 : index
    %c0_0 = arith.constant 0 : index
    %c0_1 = arith.constant 0 : index
    %0 = vector.load %arg2[%c0, %c0_0, %c0_1] : memref<1x4x256xf32, #tpu.memory_space<vmem>>, vector<1x4x256xf32>
    %c0_2 = arith.constant 0 : index
    %c0_3 = arith.constant 0 : index
    %c0_4 = arith.constant 0 : index
    %1 = vector.load %arg3[%c0_2, %c0_3, %c0_4] : memref<1x4x1xf32, #tpu.memory_space<vmem>>, vector<1x4x1xf32>
    %2 = arith.mulf %0, %0 : vector<1x4x256xf32>
    %cst = arith.constant dense<0.000000e+00> : vector<1x256xf32>
    %3 = vector.multi_reduction <add>, %2, %cst [1] : vector<1x4x256xf32> to vector<1x256xf32>
    %4 = vector.shape_cast %3 : vector<1x256xf32> to vector<1x1x256xf32>
    %cst_5 = arith.constant 1.000000e-24 : f32
    %5 = vector.broadcast %cst_5 : f32 to vector<1x1x256xf32>
    %6 = arith.maximumf %4, %5 : vector<1x1x256xf32>
    %7 = math.rsqrt %6 : vector<1x1x256xf32>
    %8 = vector.broadcast %7 : vector<1x1x256xf32> to vector<1x4x256xf32>
    %9 = vector.broadcast %1 : vector<1x4x1xf32> to vector<1x4x256xf32>
    %10 = arith.mulf %8, %9 : vector<1x4x256xf32>
    %11 = arith.mulf %0, %10 : vector<1x4x256xf32>
    %c0_6 = arith.constant 0 : index
    %c0_7 = arith.constant 0 : index
    %c0_8 = arith.constant 0 : index
    %12 = vector.load %arg4[%c0_6, %c0_7, %c0_8] : memref<1x4x256xf32, #tpu.memory_space<vmem>>, vector<1x4x256xf32>
    tpu.vector_store %arg4[%c0_6, %c0_7, %c0_8], %11 {strides = array<i32>} : memref<1x4x256xf32, #tpu.memory_space<vmem>>, vector<1x4x256xf32>,
    return
  }
  func.func @transform_0(%arg0: i32, %arg1: i32) -> (i32, i32, i32) {
    %c0_i32 = arith.constant 0 : i32
    %c0_i32_0 = arith.constant 0 : i32
    return %arg0, %c0_i32, %arg1 : i32, i32, i32
  }
  func.func @transform_1(%arg0: i32, %arg1: i32) -> (i32, i32, i32) {
    %c0_i32 = arith.constant 0 : i32
    %c0_i32_0 = arith.constant 0 : i32
    %c0_i32_1 = arith.constant 0 : i32
    %c0_i32_2 = arith.constant 0 : i32
    return %c0_i32, %c0_i32_0, %c0_i32_1 : i32, i32, i32
  }
  func.func @transform_2(%arg0: i32, %arg1: i32) -> (i32, i32, i32) {
    %c0_i32 = arith.constant 0 : i32
    %c0_i32_0 = arith.constant 0 : i32
    return %arg0, %c0_i32, %arg1 : i32, i32, i32
  }
}

</mosaic_0001>

<llo_original>
// kernel: tpu_custom_call.1
$region0: #{tpu_custom_call.1}
  #allocation0 [shape = 'u32[]', space=smem, size = 0x4, offset = 0x4, fixed_abs, tag = 'smem constant byte address 0x4 - core index']
  #allocation1 [shape = 'u32[144,128]{1,0:T(1,128)}', space=vmem, size = 0x12000, scoped, tag = 'internal scratch']
  %s0 = inlined_call_operand.hbm [shape: f32[2,4,256], index: 0, kind: input, shape index: {}]
  %s1 = inlined_call_operand.vmem [shape: f32[1,4,1], index: 1, kind: input, shape index: {}]
  %s2 = inlined_call_operand.hbm [shape: f32[2,4,256], index: 2, kind: output, shape index: {}]
  %s3 = sld [smem:[#allocation0]]
  $region45: #{tpu_custom_call.1} parent=0
    _
  %s5 = ssub.s32 1, %s3
  %s6 = scalar_select 0, %s5, %s3
  $region1: #{tpu_custom_call.1} parent=0
    #allocation2 [shape = 'u8[8192]{0}', space=vmem, size = 0x2000, scoped, tag = 'input window, operand 0']
    #allocation3 [shape = 's32[2]{0}', space=sflag, size = 0x8, scoped, tag = 'scoped memory for tpu_custom_call.1']
    #allocation4 [shape = 's32[2]{0}', space=sflag, size = 0x8, scoped, tag = 'scoped memory for tpu_custom_call.1']
    #allocation5 [shape = 'u8[8192]{0}', space=vmem, size = 0x2000, scoped, tag = 'output window, operand 0']
    %7 = vsyncpa [#allocation3], 0
    %s8 = scalar_lea.sflag [#allocation3], 1
    %9 = vsyncpa %s8, 0
    %10 = vsyncpa [#allocation4], 0
    %s11 = scalar_lea.sflag [#allocation4], 1
    %12 = vsyncpa %s11, 0
    loop: start=0, step=1, limit=4
    $region2: #{tpu_custom_call.1} parent=1 // loop_pre_header
      _
    $region3: #{tpu_custom_call.1} parent=1 // loop_header
      %s14 = sphi 0, %s18
      %p15 = scmp.ge.s32.totalorder %s14, 4
      %s21 = sphi 0, %s33
      %s22 = sphi 0, %s29
      %s23 = sphi 0, %s21
      %s24 = sphi 0, %s22
      %s25 = sphi 0, %s23
      %s26 = sphi 0, %s24
      %s38 = sphi 0, %s40
      %s41 = sphi 0, %s38
      %s42 = sphi 0, %s41
      %s58 = sphi 0, %s42
      %s62 = sphi 0, %s62
      %s64 = sphi 0, %s62
      %s65 = sphi 0, %s64
      %s79 = sphi 0, %s65
      %s87 = sphi 0, %s89
      %s90 = sphi 0, %s87
      %s91 = sphi 0, %s90
      %s107 = sphi 0, %s91
    $region4: #{tpu_custom_call.1} parent=1 // loop_header_branch
      %17 = sbr.rel (%p15) target = $region8
    $region5: #{tpu_custom_call.1} parent=1 // loop_body
      %s19 = ssub.s32 %s14, 1
      %s20 = ssub.s32 %s14, 2
      %s27 = sadd.s32 1, %s22
      %p28 = scmp.ge.s32.totalorder %s27, 1
      %s29 = scalar_select %p28, 0, %s27
      %s30 = sadd.s32 1, %s21
      %s31 = scalar_select %p28, %s30, %s21
      %p32 = scmp.ge.s32.totalorder %s31, 2
      %s33 = scalar_select %p32, 0, %s31
      %s34 = ssub.s32 %s21, %s33
      %s35 = ssub.s32 %s22, %s29
      %s36 = sor.u32 %s34, %s35
      %p37 = scmp.eq.s32.totalorder %s36, 0
      %s39 = sadd.s32 %s38, 1
      %s40 = scalar_select %p37, %s38, %s39
      %p43 = pneg %p37
      %p44 = scmp.eq.s32.totalorder %s14, 1
      %p45 = por %p43, %p44
      %p46 = scmp.ne.s32.totalorder %s38, %s41
      %p47 = scmp.eq.s32.totalorder %s14, 0
      %p48 = por %p46, %p47
      %p49 = scmp.ne.s32.totalorder %s38, %s41
      %p50 = scmp.eq.s32.totalorder %s19, 1
      %p51 = por %p49, %p50
      %p52 = scmp.ne.s32.totalorder %s41, %s42
      %p53 = scmp.eq.s32.totalorder %s19, 0
      %p54 = por %p52, %p53
      %p55 = scmp.ne.s32.totalorder %s41, %s42
      %p56 = scmp.eq.s32.totalorder %s20, 1
      %p57 = por %p55, %p56
      %p59 = scmp.ne.s32.totalorder %s42, %s58
      %p60 = scmp.eq.s32.totalorder %s20, 0
      %p61 = por %p59, %p60
      %s63 = sadd.s32 %s62, 1
      %p66 = scmp.eq.s32.totalorder %s14, 1
      %p67 = scmp.ne.s32.totalorder %s62, %s64
      %p68 = scmp.eq.s32.totalorder %s14, 0
      %p69 = por %p67, %p68
      %p70 = scmp.ne.s32.totalorder %s62, %s64
      %p71 = scmp.eq.s32.totalorder %s19, 1
      %p72 = por %p70, %p71
      %p73 = scmp.ne.s32.totalorder %s64, %s65
      %p74 = scmp.eq.s32.totalorder %s19, 0
      %p75 = por %p73, %p74
      %p76 = scmp.ne.s32.totalorder %s64, %s65
      %p77 = scmp.eq.s32.totalorder %s20, 1
      %p78 = por %p76, %p77
      %p80 = scmp.ne.s32.totalorder %s65, %s79
      %p81 = scmp.eq.s32.totalorder %s20, 0
      %p82 = por %p80, %p81
      %s83 = ssub.s32 %s21, %s33
      %s84 = ssub.s32 %s22, %s29
      %s85 = sor.u32 %s83, %s84
      %p86 = scmp.eq.s32.totalorder %s85, 0
      %s88 = sadd.s32 %s87, 1
      %s89 = scalar_select %p86, %s87, %s88
      %p92 = pneg %p86
      %p93 = scmp.eq.s32.totalorder %s14, 1
      %p94 = por %p92, %p93
      %p95 = scmp.ne.s32.totalorder %s87, %s90
      %p96 = scmp.eq.s32.totalorder %s14, 0
      %p97 = por %p95, %p96
      %p98 = scmp.ne.s32.totalorder %s87, %s90
      %p99 = scmp.eq.s32.totalorder %s19, 1
      %p100 = por %p98, %p99
      %p101 = scmp.ne.s32.totalorder %s90, %s91
      %p102 = scmp.eq.s32.totalorder %s19, 0
      %p103 = por %p101, %p102
      %p104 = scmp.ne.s32.totalorder %s90, %s91
      %p105 = scmp.eq.s32.totalorder %s20, 1
      %p106 = por %p104, %p105
      %p108 = scmp.ne.s32.totalorder %s91, %s107
      %p109 = scmp.eq.s32.totalorder %s20, 0
      %p110 = por %p108, %p109
      %p111 = scmp.le.s32.totalorder 1, %s14
      %p112 = scmp.lt.s32.totalorder %s14, 3
      %p113 = pnand %p111, %p112
      %p114 = pneg %p113
      // Predicated region
      $region9: #{tpu_custom_call.1} parent=5 // pred_check
        _
      $region10: #{tpu_custom_call.1} parent=5 // pred_check_branch
        %116 = sbr.rel (%p113) target = $region12
      $region11: #{tpu_custom_call.1} parent=5 // pred_region
        %s117 = ssub.s32 %s14, 1
        // Predicated region
        $region13: #{tpu_custom_call.1} parent=11 // pred_check
          %p118 = pneg %p75
        $region14: #{tpu_custom_call.1} parent=11 // pred_check_branch
          %120 = sbr.rel (%p118) target = $region16
        $region15: #{tpu_custom_call.1} parent=11 // pred_region
          _
        $region16: #{tpu_custom_call.1} parent=11 // pred_fallthru
          _
      $region12: #{tpu_custom_call.1} parent=5 // pred_fallthru
        _
      %p121 = scmp.lt.s32.totalorder %s14, 2
      // Predicated region
      $region17: #{tpu_custom_call.1} parent=5 // pred_check
        %p122 = pneg %p121
      $region18: #{tpu_custom_call.1} parent=5 // pred_check_branch
        %124 = sbr.rel (%p122) target = $region20
      $region19: #{tpu_custom_call.1} parent=5 // pred_region
        // Predicated region
        $region21: #{tpu_custom_call.1} parent=19 // pred_check
          %p125 = pneg %p48
        $region22: #{tpu_custom_call.1} parent=19 // pred_check_branch
          %127 = sbr.rel (%p125) target = $region24
        $region23: #{tpu_custom_call.1} parent=19 // pred_region
          %s128 = sand.u32 %s38, 1
          %s129 = scalar_lea.sflag [#allocation3], %s128
          %s130 = sand.u32 %s38, 1
          %s131 = smul.addr %s130, 8
          %s132 = scalar_lea.vmem [#allocation2], %s131
          %s133 = smul.u32 2, %s22
          %s135 = ssub.s32 128, 128
          %136 = vsyncadd %s129, %s135
          %s137 = smul.addr %s21, 2
          %s138 = sadd.s32 %s133, %s137
          %s139 = smul.addr %s138, 64
          %s140 = scalar_lea.hbm %s0, %s139
          %s142 = sshll.u32 %s132, 4
          %s143 = int_to_ptr.vmem [resolvable:$true] %s142
          %145 = dma.hbm_to_vmem [thread:$0]  %s140, 128, %s143, %s129
        $region24: #{tpu_custom_call.1} parent=19 // pred_fallthru
          _
      $region20: #{tpu_custom_call.1} parent=5 // pred_fallthru
        _
      %p146 = scmp.le.s32.totalorder 1, %s14
      %p147 = scmp.lt.s32.totalorder %s14, 3
      %p148 = pnand %p146, %p147
      %p149 = pneg %p148
      // Predicated region
      $region25: #{tpu_custom_call.1} parent=5 // pred_check
        _
      $region26: #{tpu_custom_call.1} parent=5 // pred_check_branch
        %151 = sbr.rel (%p148) target = $region28
      $region27: #{tpu_custom_call.1} parent=5 // pred_region
        %s152 = ssub.s32 %s14, 1
        %s153 = sand.u32 %s41, 1
        %s154 = scalar_lea.sflag [#allocation3], %s153
        %s155 = sand.u32 %s41, 1
        %s156 = smul.addr %s155, 8
        %s157 = scalar_lea.vmem [#allocation2], %s156
        // Predicated region
        $region29: #{tpu_custom_call.1} parent=27 // pred_check
          %p158 = pneg %p54
        $region30: #{tpu_custom_call.1} parent=27 // pred_check_branch
          %160 = sbr.rel (%p158) target = $region32
        $region31: #{tpu_custom_call.1} parent=27 // pred_region
          %161 = dma.done %s154, 128
        $region32: #{tpu_custom_call.1} parent=27 // pred_fallthru
          _
        %s162 = sand.u32 %s41, 1
        %s163 = scalar_lea.sflag [#allocation3], %s162
        %s164 = sand.u32 %s41, 1
        %s165 = smul.addr %s164, 8
        %s166 = scalar_lea.vmem [#allocation2], %s165
        %p167 = pneg %p54
        %p168 = pneg %p51
        %p169 = pneg %p75
        %p170 = pneg %p72
        %p171 = pneg %p103
        %p172 = pneg %p100
        %s173 = sand.u32 %s90, 1
        %s174 = scalar_lea.sflag [#allocation4], %s173
        %s175 = sand.u32 %s90, 1
        %s176 = smul.addr %s175, 8
        %s177 = scalar_lea.vmem [#allocation5], %s176
        %s178 = smul.u32 2, %s24
        %s179 = smul.u32 2, %s24
        %v180 = vld [vmem:[%s157] sm:$0xff]
        %v181 = vld [vmem:[%s1] sm:$0xf]
        %v182 = vmul.f32 %v180, %v180
        %v184 = vcombine.high %v182, %v182
        %vm186 = vcmask 1043456
        %v187 = vsel %vm186, %v182, 0.0
        %v188 = vrot.slane %v187, 4
        %v189 = vadd.f32 %v187, %v188
        %v190 = vrot.slane %v189, 2
        %v191 = vadd.f32 %v189, %v190
        %v192 = vrot.slane %v191, 1
        %v193 = vadd.f32 %v191, %v192
        %v194 = vsel %vm186, %v184, 0.0
        %v195 = vrot.slane %v194, 4
        %v196 = vadd.f32 %v194, %v195
        %v197 = vrot.slane %v196, 2
        %v198 = vadd.f32 %v196, %v197
        %v199 = vrot.slane %v198, 1
        %v200 = vadd.f32 %v198, %v199
        %v201 = vmax.f32 %v193, 1e-24
        %v202 = vmax.f32 %v200, 1e-24
        %v203 = vrsqrt.pop %v201
        %v204 = vrsqrt.pop %v202
        %206 = vset.pattern.permute.xlu0 0
        %207 = vperm.xlu0 %206, %v181
        %v208 = vpop.permute.xlu0 %207
        %v210 = vmul.f32 %v203, %v208
        %v211 = vmul.f32 %v204, %v208
        %v214 = vcombine.low %v210, %v211
        %v216 = vmul.f32 %v180, %v214
        %217 = vst [vmem:[%s177] sm:$0xff] %v216
        %s218 = sand.u32 %s90, 1
        %s219 = scalar_lea.sflag [#allocation4], %s218
        %s220 = sand.u32 %s90, 1
        %s221 = smul.addr %s220, 8
        %s222 = scalar_lea.vmem [#allocation5], %s221
        // Predicated region
        $region33: #{tpu_custom_call.1} parent=27 // pred_check
          %p223 = pneg %p100
        $region34: #{tpu_custom_call.1} parent=27 // pred_check_branch
          %225 = sbr.rel (%p223) target = $region36
        $region35: #{tpu_custom_call.1} parent=27 // pred_region
          %s226 = smul.u32 2, %s24
          %s228 = ssub.s32 128, 128
          %229 = vsyncadd %s219, %s228
          %s230 = smul.addr %s23, 2
          %s231 = sadd.s32 %s226, %s230
          %s232 = smul.addr %s231, 64
          %s233 = scalar_lea.hbm %s2, %s232
          %s235 = sshll.u32 %s222, 4
          %s236 = int_to_ptr.vmem [resolvable:$true] %s235
          %238 = dma.vmem_to_hbm [thread:$0]  %s236, 128, %s233, %s219
        $region36: #{tpu_custom_call.1} parent=27 // pred_fallthru
          _
      $region28: #{tpu_custom_call.1} parent=5 // pred_fallthru
        _
      %p239 = scmp.le.s32.totalorder 2, %s14
      // Predicated region
      $region37: #{tpu_custom_call.1} parent=5 // pred_check
        %p240 = pneg %p239
      $region38: #{tpu_custom_call.1} parent=5 // pred_check_branch
        %242 = sbr.rel (%p240) target = $region40
      $region39: #{tpu_custom_call.1} parent=5 // pred_region
        %s243 = ssub.s32 %s14, 2
        // Predicated region
        $region41: #{tpu_custom_call.1} parent=39 // pred_check
          %p244 = pneg %p106
        $region42: #{tpu_custom_call.1} parent=39 // pred_check_branch
          %246 = sbr.rel (%p244) target = $region44
        $region43: #{tpu_custom_call.1} parent=39 // pred_region
          %s247 = sand.u32 %s91, 1
          %s248 = scalar_lea.sflag [#allocation4], %s247
          %s249 = sand.u32 %s91, 1
          %s250 = smul.addr %s249, 8
          %s251 = scalar_lea.vmem [#allocation5], %s250
          %252 = dma.done %s248, 128
        $region44: #{tpu_custom_call.1} parent=39 // pred_fallthru
          _
      $region40: #{tpu_custom_call.1} parent=5 // pred_fallthru
        _
    $region6: #{tpu_custom_call.1} parent=1 // loop_footer
      %s18 = sadd.s32 1, %s14
    $region7: #{tpu_custom_call.1} parent=1 // loop_footer_branch
      %13 = sbr.rel target = $region3
    $region8: #{tpu_custom_call.1} parent=1 // loop_exit
      _
    %253 = vsyncpa [#allocation3], 1
    %s254 = scalar_lea.sflag [#allocation3], 1
    %255 = vsyncpa %s254, 1
    %256 = vsyncpa [#allocation4], 1
    %s257 = scalar_lea.sflag [#allocation4], 1
    %258 = vsyncpa %s257, 1

</llo_original>
